<compile_context>
chip_gen: v6e
topology: v6e:2x2x1
jax: 0.10.0
libtpu: 0.0.40
codegen_flags: <defaults>
</compile_context>

<pallas_src>
import jax
import jax.numpy as jnp
from jax.experimental import pallas as pl
from jax.experimental.pallas import tpu as pltpu

EPS = 1e-5
TILE_M = 512     # rows (N*Ho*Wo) per grid step -- fits comfortably in VMEM on
                 # v5e (16 MiB scoped default) through v7x (64 MiB physical)
TILE_N = 128     # output-channel tile (lane-dense, one MXU column block)


def _conv_stats_kernel(p_ref, w_ref, y_ref, stats_ref):
    """Pass 1: y = patches @ W (bf16 in, f32 acc) + per-channel sum/sumsq."""
    # grid = (n_cout_tiles [parallel], n_m_tiles [arbitrary])
    @pl.when(pl.program_id(1) == 0)
    def _init():
        stats_ref[...] = jnp.zeros_like(stats_ref)

    y = jnp.dot(p_ref[...], w_ref[...], preferred_element_type=jnp.float32)
    y_ref[...] = y                                    # (TILE_M, TILE_N) f32
    stats_ref[...] += jnp.concatenate(
        [jnp.sum(y, axis=0, keepdims=True),
         jnp.sum(y * y, axis=0, keepdims=True)], axis=0)


def _bn_glu_kernel(ya_ref, yb_ref, sa_ref, ta_ref, sb_ref, tb_ref, o_ref):
    """Pass 2: BN folded to scale/shift (one FMA per half) + GLU."""
    a = ya_ref[...] * sa_ref[...] + ta_ref[...]
    b = yb_ref[...] * sb_ref[...] + tb_ref[...]
    o_ref[...] = a * jax.nn.sigmoid(b)


def simple_decoder_block(x_nchw, w_oihw, gamma, beta):
    """Forward pass of SimpleDecoderBlock.  x_nchw: (N, Cin, H, W)."""
    N, Cin, H, W = x_nchw.shape
    Cout2 = w_oihw.shape[0]                 # = 2 * fmap_out
    half = Cout2 // 2
    KH = KW = 3
    Ho, Wo = 2 * H, 2 * W
    K = KH * KW * Cin
    M = N * Ho * Wo

    # lane-dense padding: each GLU half padded to a multiple of 128 lanes
    HALF_P = ((half + 127) // 128) * 128
    COUT_P = 2 * HALF_P
    M_P = ((M + TILE_M - 1) // TILE_M) * TILE_M

    # --- glue: NCHW -> NHWC, nearest 2x upsample, pad, 3x3 im2col (bf16) ----
    x = jnp.transpose(x_nchw, (0, 2, 3, 1)).astype(jnp.float32)     # (N,H,W,Cin)
    xu = jnp.repeat(jnp.repeat(x, 2, axis=1), 2, axis=2)            # (N,Ho,Wo,Cin)
    xp = jnp.pad(xu, ((0, 0), (1, 1), (1, 1), (0, 0)))
    cols = []
    for kh in range(KH):
        for kw in range(KW):
            cols.append(xp[:, kh:kh + Ho, kw:kw + Wo, :])           # (N,Ho,Wo,Cin)
    patches = jnp.stack(cols, axis=3).reshape(M, K)                 # (M, K)
    patches = jnp.pad(patches, ((0, M_P - M), (0, 0))).astype(jnp.bfloat16)

    # OIHW -> (kh,kw,cin,cout) -> (K, Cout2); GLU halves go into separately
    # 128-padded column groups so the in-kernel GLU split is lane-aligned.
    wmat = jnp.transpose(w_oihw, (2, 3, 1, 0)).reshape(K, Cout2).astype(jnp.float32)
    wmat_p = jnp.zeros((K, COUT_P), jnp.float32)
    wmat_p = wmat_p.at[:, :half].set(wmat[:, :half])
    wmat_p = wmat_p.at[:, HALF_P:HALF_P + half].set(wmat[:, half:])
    wmat_p = wmat_p.astype(jnp.bfloat16)

    g32 = gamma.astype(jnp.float32)
    b32 = beta.astype(jnp.float32)
    gamma_p = jnp.zeros((COUT_P,), jnp.float32)
    gamma_p = gamma_p.at[:half].set(g32[:half])
    gamma_p = gamma_p.at[HALF_P:HALF_P + half].set(g32[half:])
    beta_p = jnp.zeros((COUT_P,), jnp.float32)
    beta_p = beta_p.at[:half].set(b32[:half])
    beta_p = beta_p.at[HALF_P:HALF_P + half].set(b32[half:])

    n_m = M_P // TILE_M
    n_n = COUT_P // TILE_N

    # --- pass 1: tiled conv-matmul + global per-channel sum / sumsq ---------
    y, stats = pl.pallas_call(
        _conv_stats_kernel,
        out_shape=(jax.ShapeDtypeStruct((M_P, COUT_P), jnp.float32),
                   jax.ShapeDtypeStruct((2, COUT_P), jnp.float32)),
        grid=(n_n, n_m),
        in_specs=[
            pl.BlockSpec((TILE_M, K), lambda j, i: (i, 0)),
            pl.BlockSpec((K, TILE_N), lambda j, i: (0, j)),
        ],
        out_specs=(
            pl.BlockSpec((TILE_M, TILE_N), lambda j, i: (i, j)),
            pl.BlockSpec((2, TILE_N), lambda j, i: (0, j)),   # resident acc over i
        ),
        compiler_params=pltpu.CompilerParams(
            dimension_semantics=("parallel", "arbitrary")),
    )(patches, wmat_p)

    # --- fold BN (train-mode, biased variance over the real M rows) ---------
    s, ss = stats[0], stats[1]
    mean = s / M
    var = jnp.maximum(ss / M - mean * mean, 0.0)
    scale = gamma_p * jax.lax.rsqrt(var + EPS)
    shift = beta_p - mean * scale
    sa = scale[:HALF_P].reshape(1, HALF_P)
    ta = shift[:HALF_P].reshape(1, HALF_P)
    sb = scale[HALF_P:].reshape(1, HALF_P)
    tb = shift[HALF_P:].reshape(1, HALF_P)

    # --- pass 2: BN affine + GLU, tiled & megacore-parallel -----------------
    out = pl.pallas_call(
        _bn_glu_kernel,
        out_shape=jax.ShapeDtypeStruct((M_P, HALF_P), jnp.float32),
        grid=(n_m,),
        in_specs=[
            pl.BlockSpec((TILE_M, HALF_P), lambda i: (i, 0)),  # GLU "a" half of y
            pl.BlockSpec((TILE_M, HALF_P), lambda i: (i, 1)),  # GLU "b" half of y
            pl.BlockSpec((1, HALF_P), lambda i: (0, 0)),
            pl.BlockSpec((1, HALF_P), lambda i: (0, 0)),
            pl.BlockSpec((1, HALF_P), lambda i: (0, 0)),
            pl.BlockSpec((1, HALF_P), lambda i: (0, 0)),
        ],
        out_specs=pl.BlockSpec((TILE_M, HALF_P), lambda i: (i, 0)),
        compiler_params=pltpu.CompilerParams(
            dimension_semantics=("parallel",)),
    )(y, y, sa, ta, sb, tb)

    # --- glue: drop padding, back to NCHW ------------------------------------
    out = out[:M, :half].reshape(N, Ho, Wo, half)
    return jnp.transpose(out, (0, 3, 1, 2))                 # (N, fmap_out, Ho, Wo)


def _reference(x_nchw, w_oihw, gamma, beta):
    """Pure-JAX f32 reference matching PyTorch forward semantics."""
    x = x_nchw.astype(jnp.float32)
    xu = jnp.repeat(jnp.repeat(x, 2, axis=2), 2, axis=3)     # nearest 2x
    conv = jax.lax.conv_general_dilated(
        xu, w_oihw.astype(jnp.float32), window_strides=(1, 1),
        padding=((1, 1), (1, 1)), dimension_numbers=("NCHW", "OIHW", "NCHW"))
    mean = conv.mean(axis=(0, 2, 3), keepdims=True)
    var = conv.var(axis=(0, 2, 3), keepdims=True)            # biased (BN training)
    yb = (conv - mean) * jax.lax.rsqrt(var + EPS)
    yb = yb * gamma.reshape(1, -1, 1, 1) + beta.reshape(1, -1, 1, 1)
    c = yb.shape[1] // 2
    return yb[:, :c] * jax.nn.sigmoid(yb[:, c:])              # GLU(dim=1)


if __name__ == "__main__":
    key = jax.random.PRNGKey(0)
    k_x, k_w, k_g, k_b = jax.random.split(key, 4)

    # SimpleDecoderBlock(fmap_in=4, fmap_out=8) on a (2, 4, 16, 16) input
    N, Cin, H, W = 2, 4, 16, 16
    fmap_out = 8
    Cout2 = 2 * fmap_out

    x = jax.random.normal(k_x, (N, Cin, H, W), dtype=jnp.float32)
    w = 0.1 * jax.random.normal(k_w, (Cout2, Cin, 3, 3), dtype=jnp.float32)
    gamma = 1.0 + 0.1 * jax.random.normal(k_g, (Cout2,), dtype=jnp.float32)
    beta = 0.1 * jax.random.normal(k_b, (Cout2,), dtype=jnp.float32)

    out = simple_decoder_block(x, w, gamma, beta)
    jax.block_until_ready(out)

    ref = _reference(x, w, gamma, beta)
    assert out.shape == (N, fmap_out, 2 * H, 2 * W), out.shape
    # bf16 MXU operands with f32 accumulation -> tolerance covers bf16 rounding
    max_err = float(jnp.max(jnp.abs(out - ref)))
    assert jnp.allclose(out, ref, atol=3e-2, rtol=3e-2), max_err

    print("KERNEL_OK")
</pallas_src>

<mosaic_0001>
module attributes {stable_mosaic.version = 11 : i64} {
  func.func @_conv_stats_kernel(%arg0: i32, %arg1: i32, %arg2: memref<512x36xbf16, #tpu.memory_space<vmem>>, %arg3: memref<36x128xbf16, #tpu.memory_space<vmem>>, %arg4: memref<512x128xf32, #tpu.memory_space<vmem>>, %arg5: memref<2x128xf32, #tpu.memory_space<vmem>>) attributes {dimension_semantics = [#tpu.dimension_semantics<parallel>, #tpu.dimension_semantics<arbitrary>], iteration_bounds = array<i64: 2, 4>, scalar_prefetch = 0 : i64, scratch_operands = 0 : i64, tpu.core_type = #tpu.core_type<tc>, window_params = [{transform_indices = @transform_0, window_bounds = array<i64: 512, 36>}, {transform_indices = @transform_1, window_bounds = array<i64: 36, 128>}, {transform_indices = @transform_2, window_bounds = array<i64: 512, 128>}, {transform_indices = @transform_3, window_bounds = array<i64: 2, 128>}]} {
    %c0_i32 = arith.constant 0 : i32
    %0 = arith.cmpi eq, %arg1, %c0_i32 : i32
    %1 = arith.extui %0 : i1 to i32
    %c0_i32_0 = arith.constant 0 : i32
    %2 = arith.cmpi ne, %1, %c0_i32_0 : i32
    scf.if %2 {
      %cst_12 = arith.constant 0.000000e+00 : f32
      %16 = vector.broadcast %cst_12 : f32 to vector<2x128xf32>
      %c0_13 = arith.constant 0 : index
      %c0_14 = arith.constant 0 : index
      %17 = vector.load %arg5[%c0_13, %c0_14] : memref<2x128xf32, #tpu.memory_space<vmem>>, vector<2x128xf32>
      tpu.vector_store %arg5[%c0_13, %c0_14], %16 {strides = array<i32>} : memref<2x128xf32, #tpu.memory_space<vmem>>, vector<2x128xf32>,
    } else {
    }
    %c0 = arith.constant 0 : index
    %c0_1 = arith.constant 0 : index
    %3 = vector.load %arg2[%c0, %c0_1] : memref<512x36xbf16, #tpu.memory_space<vmem>>, vector<512x36xbf16>
    %c0_2 = arith.constant 0 : index
    %c0_3 = arith.constant 0 : index
    %4 = vector.load %arg3[%c0_2, %c0_3] : memref<36x128xbf16, #tpu.memory_space<vmem>>, vector<36x128xbf16>
    %cst = arith.constant dense<0.000000e+00> : vector<512x128xf32>
    %5 = tpu.matmul %3, %4, %cst {dimension_numbers = #tpu.dot_dimension_numbers<[1], [0], [0], [1], [0, 0, 1, 1], [], []>} : vector<512x36xbf16>, vector<36x128xbf16>, vector<512x128xf32> -> vector<512x128xf32>
    %c0_4 = arith.constant 0 : index
    %c0_5 = arith.constant 0 : index
    %6 = vector.load %arg4[%c0_4, %c0_5] : memref<512x128xf32, #tpu.memory_space<vmem>>, vector<512x128xf32>
    tpu.vector_store %arg4[%c0_4, %c0_5], %5 {strides = array<i32>} : memref<512x128xf32, #tpu.memory_space<vmem>>, vector<512x128xf32>,
    %c0_6 = arith.constant 0 : index
    %c0_7 = arith.constant 0 : index
    %7 = vector.load %arg5[%c0_6, %c0_7] : memref<2x128xf32, #tpu.memory_space<vmem>>, vector<2x128xf32>
    %cst_8 = arith.constant dense<0.000000e+00> : vector<128xf32>
    %8 = vector.multi_reduction <add>, %5, %cst_8 [0] : vector<512x128xf32> to vector<128xf32>
    %9 = vector.shape_cast %8 : vector<128xf32> to vector<1x128xf32>
    %10 = arith.mulf %5, %5 : vector<512x128xf32>
    %cst_9 = arith.constant dense<0.000000e+00> : vector<128xf32>
    %11 = vector.multi_reduction <add>, %10, %cst_9 [0] : vector<512x128xf32> to vector<128xf32>
    %12 = vector.shape_cast %11 : vector<128xf32> to vector<1x128xf32>
    %13 = tpu.concatenate %9, %12 in 0 : vector<1x128xf32>, vector<1x128xf32> -> vector<2x128xf32>
    %14 = arith.addf %7, %13 : vector<2x128xf32>
    %c0_10 = arith.constant 0 : index
    %c0_11 = arith.constant 0 : index
    %15 = vector.load %arg5[%c0_10, %c0_11] : memref<2x128xf32, #tpu.memory_space<vmem>>, vector<2x128xf32>
    tpu.vector_store %arg5[%c0_10, %c0_11], %14 {strides = array<i32>} : memref<2x128xf32, #tpu.memory_space<vmem>>, vector<2x128xf32>,
    return
  }
  func.func @transform_0(%arg0: i32, %arg1: i32) -> (i32, i32) {
    %c0_i32 = arith.constant 0 : i32
    %c0_i32_0 = arith.constant 0 : i32
    return %arg1, %c0_i32 : i32, i32
  }
  func.func @transform_1(%arg0: i32, %arg1: i32) -> (i32, i32) {
    %c0_i32 = arith.constant 0 : i32
    %c0_i32_0 = arith.constant 0 : i32
    return %c0_i32, %arg0 : i32, i32
  }
  func.func @transform_2(%arg0: i32, %arg1: i32) -> (i32, i32) {
    %c0_i32 = arith.constant 0 : i32
    return %arg1, %arg0 : i32, i32
  }
  func.func @transform_3(%arg0: i32, %arg1: i32) -> (i32, i32) {
    %c0_i32 = arith.constant 0 : i32
    %c0_i32_0 = arith.constant 0 : i32
    return %c0_i32, %arg0 : i32, i32
  }
}

</mosaic_0001>

<llo_original>
// kernel: tpu_custom_call.1
$region0: #{tpu_custom_call.1}
  #allocation0 [shape = 'u32[]', space=smem, size = 0x4, offset = 0x4, fixed_abs, tag = 'smem constant byte address 0x4 - core index']
  #allocation1 [shape = 'u32[144,128]{1,0:T(1,128)}', space=vmem, size = 0x12000, scoped, tag = 'internal scratch']
  %s0 = inlined_call_operand.vmem [shape: bf16[2048,36], index: 0, kind: input, shape index: {}]
  %s1 = inlined_call_operand.hbm [shape: bf16[36,256], index: 1, kind: input, shape index: {}]
  %s2 = inlined_call_operand.hbm [shape: f32[2048,256], index: 2, kind: output, shape index: {0}]
  %s3 = inlined_call_operand.hbm [shape: f32[2,256], index: 3, kind: output, shape index: {1}]
  %4 = xla_tuple %s2, %s3
  %s5 = sld [smem:[#allocation0]]
  $region57: #{tpu_custom_call.1} parent=0
    _
  %s7 = ssub.s32 1, %s5
  %s8 = scalar_select 0, %s7, %s5
  $region1: #{tpu_custom_call.1} parent=0
    #allocation2 [shape = 'u8[20480]{0}', space=vmem, size = 0x5000, scoped, tag = 'input window, operand 1']
    #allocation3 [shape = 's32[2]{0}', space=sflag, size = 0x8, scoped, tag = 'scoped memory for tpu_custom_call.1']
    #allocation4 [shape = 's32[2]{0}', space=sflag, size = 0x8, scoped, tag = 'scoped memory for tpu_custom_call.1']
    #allocation5 [shape = 'u8[524288]{0}', space=vmem, size = 0x80000, scoped, tag = 'output window, operand 0']
    #allocation6 [shape = 'u8[2048]{0}', space=vmem, size = 0x800, scoped, tag = 'output window, operand 1']
    #allocation7 [shape = 's32[2]{0}', space=sflag, size = 0x8, scoped, tag = 'scoped memory for tpu_custom_call.1']
    %9 = vsyncpa [#allocation3], 0
    %s10 = scalar_lea.sflag [#allocation3], 1
    %11 = vsyncpa %s10, 0
    %12 = vsyncpa [#allocation4], 0
    %s13 = scalar_lea.sflag [#allocation4], 1
    %14 = vsyncpa %s13, 0
    %15 = vsyncpa [#allocation7], 0
    %s16 = scalar_lea.sflag [#allocation7], 1
    %17 = vsyncpa %s16, 0
    loop: start=0, step=1, limit=10
    $region2: #{tpu_custom_call.1} parent=1 // loop_pre_header
      _
    $region3: #{tpu_custom_call.1} parent=1 // loop_header
      %s19 = sphi 0, %s23
      %p20 = scmp.ge.s32.totalorder %s19, 10
      %s26 = sphi 0, %s38
      %s27 = sphi 0, %s34
      %s28 = sphi 0, %s26
      %s29 = sphi 0, %s27
      %s30 = sphi 0, %s28
      %s31 = sphi 0, %s29
      %s41 = sphi 0, %s43
      %s44 = sphi 0, %s41
      %s45 = sphi 0, %s44
      %s61 = sphi 0, %s45
      %s67 = sphi 0, %s69
      %s70 = sphi 0, %s67
      %s71 = sphi 0, %s70
      %s87 = sphi 0, %s71
      %s95 = sphi 0, %s97
      %s98 = sphi 0, %s95
      %s99 = sphi 0, %s98
      %s115 = sphi 0, %s99
      %s121 = sphi 0, %s123
      %s124 = sphi 0, %s121
      %s125 = sphi 0, %s124
      %s141 = sphi 0, %s125
    $region4: #{tpu_custom_call.1} parent=1 // loop_header_branch
      %22 = sbr.rel (%p20) target = $region8
    $region5: #{tpu_custom_call.1} parent=1 // loop_body
      %s24 = ssub.s32 %s19, 1
      %s25 = ssub.s32 %s19, 2
      %s32 = sadd.s32 1, %s27
      %p33 = scmp.ge.s32.totalorder %s32, 4
      %s34 = scalar_select %p33, 0, %s32
      %s35 = sadd.s32 1, %s26
      %s36 = scalar_select %p33, %s35, %s26
      %p37 = scmp.ge.s32.totalorder %s36, 2
      %s38 = scalar_select %p37, 0, %s36
      %s39 = ssub.s32 %s27, %s34
      %p40 = scmp.eq.s32.totalorder %s39, 0
      %s42 = sadd.s32 %s41, 1
      %s43 = scalar_select %p40, %s41, %s42
      %p46 = pneg %p40
      %p47 = scmp.eq.s32.totalorder %s19, 7
      %p48 = por %p46, %p47
      %p49 = scmp.ne.s32.totalorder %s41, %s44
      %p50 = scmp.eq.s32.totalorder %s19, 0
      %p51 = por %p49, %p50
      %p52 = scmp.ne.s32.totalorder %s41, %s44
      %p53 = scmp.eq.s32.totalorder %s24, 7
      %p54 = por %p52, %p53
      %p55 = scmp.ne.s32.totalorder %s44, %s45
      %p56 = scmp.eq.s32.totalorder %s24, 0
      %p57 = por %p55, %p56
      %p58 = scmp.ne.s32.totalorder %s44, %s45
      %p59 = scmp.eq.s32.totalorder %s25, 7
      %p60 = por %p58, %p59
      %p62 = scmp.ne.s32.totalorder %s45, %s61
      %p63 = scmp.eq.s32.totalorder %s25, 0
      %p64 = por %p62, %p63
      %s65 = ssub.s32 %s26, %s38
      %p66 = scmp.eq.s32.totalorder %s65, 0
      %s68 = sadd.s32 %s67, 1
      %s69 = scalar_select %p66, %s67, %s68
      %p72 = pneg %p66
      %p73 = scmp.eq.s32.totalorder %s19, 7
      %p74 = por %p72, %p73
      %p75 = scmp.ne.s32.totalorder %s67, %s70
      %p76 = scmp.eq.s32.totalorder %s19, 0
      %p77 = por %p75, %p76
      %p78 = scmp.ne.s32.totalorder %s67, %s70
      %p79 = scmp.eq.s32.totalorder %s24, 7
      %p80 = por %p78, %p79
      %p81 = scmp.ne.s32.totalorder %s70, %s71
      %p82 = scmp.eq.s32.totalorder %s24, 0
      %p83 = por %p81, %p82
      %p84 = scmp.ne.s32.totalorder %s70, %s71
      %p85 = scmp.eq.s32.totalorder %s25, 7
      %p86 = por %p84, %p85
      %p88 = scmp.ne.s32.totalorder %s71, %s87
      %p89 = scmp.eq.s32.totalorder %s25, 0
      %p90 = por %p88, %p89
      %s91 = ssub.s32 %s27, %s34
      %s92 = ssub.s32 %s26, %s38
      %s93 = sor.u32 %s91, %s92
      %p94 = scmp.eq.s32.totalorder %s93, 0
      %s96 = sadd.s32 %s95, 1
      %s97 = scalar_select %p94, %s95, %s96
      %p100 = pneg %p94
      %p101 = scmp.eq.s32.totalorder %s19, 7
      %p102 = por %p100, %p101
      %p103 = scmp.ne.s32.totalorder %s95, %s98
      %p104 = scmp.eq.s32.totalorder %s19, 0
      %p105 = por %p103, %p104
      %p106 = scmp.ne.s32.totalorder %s95, %s98
      %p107 = scmp.eq.s32.totalorder %s24, 7
      %p108 = por %p106, %p107
      %p109 = scmp.ne.s32.totalorder %s98, %s99
      %p110 = scmp.eq.s32.totalorder %s24, 0
      %p111 = por %p109, %p110
      %p112 = scmp.ne.s32.totalorder %s98, %s99
      %p113 = scmp.eq.s32.totalorder %s25, 7
      %p114 = por %p112, %p113
      %p116 = scmp.ne.s32.totalorder %s99, %s115
      %p117 = scmp.eq.s32.totalorder %s25, 0
      %p118 = por %p116, %p117
      %s119 = ssub.s32 %s26, %s38
      %p120 = scmp.eq.s32.totalorder %s119, 0
      %s122 = sadd.s32 %s121, 1
      %s123 = scalar_select %p120, %s121, %s122
      %p126 = pneg %p120
      %p127 = scmp.eq.s32.totalorder %s19, 7
      %p128 = por %p126, %p127
      %p129 = scmp.ne.s32.totalorder %s121, %s124
      %p130 = scmp.eq.s32.totalorder %s19, 0
      %p131 = por %p129, %p130
      %p132 = scmp.ne.s32.totalorder %s121, %s124
      %p133 = scmp.eq.s32.totalorder %s24, 7
      %p134 = por %p132, %p133
      %p135 = scmp.ne.s32.totalorder %s124, %s125
      %p136 = scmp.eq.s32.totalorder %s24, 0
      %p137 = por %p135, %p136
      %p138 = scmp.ne.s32.totalorder %s124, %s125
      %p139 = scmp.eq.s32.totalorder %s25, 7
      %p140 = por %p138, %p139
      %p142 = scmp.ne.s32.totalorder %s125, %s141
      %p143 = scmp.eq.s32.totalorder %s25, 0
      %p144 = por %p142, %p143
      %p145 = scmp.le.s32.totalorder 1, %s19
      %p146 = scmp.lt.s32.totalorder %s19, 9
      %p147 = pnand %p145, %p146
      %p148 = pneg %p147
      // Predicated region
      $region9: #{tpu_custom_call.1} parent=5 // pred_check
        _
      $region10: #{tpu_custom_call.1} parent=5 // pred_check_branch
        %150 = sbr.rel (%p147) target = $region12
      $region11: #{tpu_custom_call.1} parent=5 // pred_region
        %s151 = ssub.s32 %s19, 1
      $region12: #{tpu_custom_call.1} parent=5 // pred_fallthru
        _
      %p152 = scmp.lt.s32.totalorder %s19, 8
      // Predicated region
      $region13: #{tpu_custom_call.1} parent=5 // pred_check
        %p153 = pneg %p152
      $region14: #{tpu_custom_call.1} parent=5 // pred_check_branch
        %155 = sbr.rel (%p153) target = $region16
      $region15: #{tpu_custom_call.1} parent=5 // pred_region
        // Predicated region
        $region17: #{tpu_custom_call.1} parent=15 // pred_check
          %p156 = pneg %p51
        $region18: #{tpu_custom_call.1} parent=15 // pred_check_branch
          %158 = sbr.rel (%p156) target = $region20
        $region19: #{tpu_custom_call.1} parent=15 // pred_region
          %s159 = smul.u32 64, %s27
          %p160 = scmp.lt.s32.totalorder %s159, 255
          %s161 = scalar_select %p160, %s159, 255
          %s162 = smul.addr %s161, 4
          %s163 = scalar_lea.vmem %s0, %s162
          %s164 = smul.u32 64, %s27
        $region20: #{tpu_custom_call.1} parent=15 // pred_fallthru
          _
        // Predicated region
        $region21: #{tpu_custom_call.1} parent=15 // pred_check
          %p165 = pneg %p77
        $region22: #{tpu_custom_call.1} parent=15 // pred_check_branch
          %167 = sbr.rel (%p165) target = $region24
        $region23: #{tpu_custom_call.1} parent=15 // pred_region
          %s168 = sand.u32 %s67, 1
          %s169 = scalar_lea.sflag [#allocation3], %s168
          %s170 = sand.u32 %s67, 1
          %s171 = smul.addr %s170, 20
          %s172 = scalar_lea.vmem [#allocation2], %s171
          %s174 = ssub.s32 320, 320
          %175 = vsyncadd %s169, %s174
          %s176 = smul.addr %s26, 64
          %s177 = scalar_lea.hbm %s1, %s176
          %s178 = sshll.u32 %s172, 4
          %s179 = int_to_ptr.vmem [resolvable:$true] %s178
          %184 = dma.hbm_to_vmem [thread:$0]  %s177, 320, %s179, %s169, 128, 64, 4
        $region24: #{tpu_custom_call.1} parent=15 // pred_fallthru
          _
      $region16: #{tpu_custom_call.1} parent=5 // pred_fallthru
        _
      %p185 = scmp.le.s32.totalorder 1, %s19
      %p186 = scmp.lt.s32.totalorder %s19, 9
      %p187 = pnand %p185, %p186
      %p188 = pneg %p187
      // Predicated region
      $region25: #{tpu_custom_call.1} parent=5 // pred_check
        _
      $region26: #{tpu_custom_call.1} parent=5 // pred_check_branch
        %190 = sbr.rel (%p187) target = $region28
      $region27: #{tpu_custom_call.1} parent=5 // pred_region
        %s191 = ssub.s32 %s19, 1
        %s192 = sand.u32 %s70, 1
        %s193 = scalar_lea.sflag [#allocation3], %s192
        %s194 = sand.u32 %s70, 1
        %s195 = smul.addr %s194, 20
        %s196 = scalar_lea.vmem [#allocation2], %s195
        // Predicated region
        $region29: #{tpu_custom_call.1} parent=27 // pred_check
          %p197 = pneg %p83
        $region30: #{tpu_custom_call.1} parent=27 // pred_check_branch
          %199 = sbr.rel (%p197) target = $region32
        $region31: #{tpu_custom_call.1} parent=27 // pred_region
          %200 = dma.done %s193, 320
        $region32: #{tpu_custom_call.1} parent=27 // pred_fallthru
          _
        %s201 = smul.u32 64, %s29
        %p202 = scmp.lt.s32.totalorder %s201, 255
        %s203 = scalar_select %p202, %s201, 255
        %s204 = smul.addr %s203, 4
        %s205 = scalar_lea.vmem %s0, %s204
        %p206 = pneg %p57
        %p207 = pneg %p54
        %s208 = sand.u32 %s70, 1
        %s209 = scalar_lea.sflag [#allocation3], %s208
        %s210 = sand.u32 %s70, 1
        %s211 = smul.addr %s210, 20
        %s212 = scalar_lea.vmem [#allocation2], %s211
        %p213 = pneg %p83
        %p214 = pneg %p80
        %p215 = pneg %p111
        %p216 = pneg %p108
        %s217 = sand.u32 %s98, 1
        %s218 = scalar_lea.sflag [#allocation4], %s217
        %s219 = sand.u32 %s98, 1
        %s220 = smul.addr %s219, 512
        %s221 = scalar_lea.vmem [#allocation5], %s220
        %p222 = pneg %p137
        %p223 = pneg %p134
        %s224 = sand.u32 %s124, 1
        %s225 = scalar_lea.sflag [#allocation7], %s224
        %s226 = sand.u32 %s124, 1
        %s227 = smul.addr %s226, 2
        %s228 = scalar_lea.vmem [#allocation6], %s227
        %s229 = smul.u32 64, %s29
        %p230 = scmp.lt.s32.totalorder %s229, 255
        %s231 = scalar_select %p230, %s229, 255
        %s232 = smul.addr %s231, 4
        %s233 = scalar_lea.vmem %s0, %s232
        %s234 = smul.u32 64, %s29
        %s235 = smul.u32 64, %s29
        %p237 = scmp.eq.s32.totalorder %s29, 0
        // Predicated region
        $region33: #{tpu_custom_call.1} parent=27 // pred_check
          %p238 = pneg %p237
        $region34: #{tpu_custom_call.1} parent=27 // pred_check_branch
          %240 = sbr.rel (%p238) target = $region36
        $region35: #{tpu_custom_call.1} parent=27 // pred_region
          %241 = vst [vmem:[%s228] sm:$0x3] 0.0
        $region36: #{tpu_custom_call.1} parent=27 // pred_fallthru
          _
        %v242 = vld [vmem:[%s233] sm:$0xf]
        %v243 = vld [vmem:[%s233 + $0x4] sm:$0xf]
        %v244 = vld [vmem:[%s233 + $0x8] sm:$0xf]
        %v245 = vld [vmem:[%s233 + $0xc] sm:$0xf]
        %v246 = vld [vmem:[%s233 + $0x10] sm:$0xf]
        %v247 = vld [vmem:[%s233 + $0x14] sm:$0xf]
        %v248 = vld [vmem:[%s233 + $0x18] sm:$0xf]
        %v249 = vld [vmem:[%s233 + $0x1c] sm:$0xf]
        %v250 = vld [vmem:[%s233 + $0x20] sm:$0xf]
        %v251 = vld [vmem:[%s233 + $0x24] sm:$0xf]
        %v252 = vld [vmem:[%s233 + $0x28] sm:$0xf]
        %v253 = vld [vmem:[%s233 + $0x2c] sm:$0xf]
        %v254 = vld [vmem:[%s233 + $0x30] sm:$0xf]
        %v255 = vld [vmem:[%s233 + $0x34] sm:$0xf]
        %v256 = vld [vmem:[%s233 + $0x38] sm:$0xf]
        %v257 = vld [vmem:[%s233 + $0x3c] sm:$0xf]
        %v258 = vld [vmem:[%s233 + $0x40] sm:$0xf]
        %v259 = vld [vmem:[%s233 + $0x44] sm:$0xf]
        %v260 = vld [vmem:[%s233 + $0x48] sm:$0xf]
        %v261 = vld [vmem:[%s233 + $0x4c] sm:$0xf]
        %v262 = vld [vmem:[%s233 + $0x50] sm:$0xf]
        %v263 = vld [vmem:[%s233 + $0x54] sm:$0xf]
        %v264 = vld [vmem:[%s233 + $0x58] sm:$0xf]
        %v265 = vld [vmem:[%s233 + $0x5c] sm:$0xf]
        %v266 = vld [vmem:[%s233 + $0x60] sm:$0xf]
        %v267 = vld [vmem:[%s233 + $0x64] sm:$0xf]
        %v268 = vld [vmem:[%s233 + $0x68] sm:$0xf]
        %v269 = vld [vmem:[%s233 + $0x6c] sm:$0xf]
        %v270 = vld [vmem:[%s233 + $0x70] sm:$0xf]
        %v271 = vld [vmem:[%s233 + $0x74] sm:$0xf]
        %v272 = vld [vmem:[%s233 + $0x78] sm:$0xf]
        %v273 = vld [vmem:[%s233 + $0x7c] sm:$0xf]
        %v274 = vld [vmem:[%s233 + $0x80] sm:$0xf]
        %v275 = vld [vmem:[%s233 + $0x84] sm:$0xf]
        %v276 = vld [vmem:[%s233 + $0x88] sm:$0xf]
        %v277 = vld [vmem:[%s233 + $0x8c] sm:$0xf]
        %v278 = vld [vmem:[%s233 + $0x90] sm:$0xf]
        %v279 = vld [vmem:[%s233 + $0x94] sm:$0xf]
        %v280 = vld [vmem:[%s233 + $0x98] sm:$0xf]
        %v281 = vld [vmem:[%s233 + $0x9c] sm:$0xf]
        %v282 = vld [vmem:[%s233 + $0xa0] sm:$0xf]
        %v283 = vld [vmem:[%s233 + $0xa4] sm:$0xf]
        %v284 = vld [vmem:[%s233 + $0xa8] sm:$0xf]
        %v285 = vld [vmem:[%s233 + $0xac] sm:$0xf]
        %v286 = vld [vmem:[%s233 + $0xb0] sm:$0xf]
        %v287 = vld [vmem:[%s233 + $0xb4] sm:$0xf]
        %v288 = vld [vmem:[%s233 + $0xb8] sm:$0xf]
        %v289 = vld [vmem:[%s233 + $0xbc] sm:$0xf]
        %v290 = vld [vmem:[%s233 + $0xc0] sm:$0xf]
        %v291 = vld [vmem:[%s233 + $0xc4] sm:$0xf]
        %v292 = vld [vmem:[%s233 + $0xc8] sm:$0xf]
        %v293 = vld [vmem:[%s233 + $0xcc] sm:$0xf]
        %v294 = vld [vmem:[%s233 + $0xd0] sm:$0xf]
        %v295 = vld [vmem:[%s233 + $0xd4] sm:$0xf]
        %v296 = vld [vmem:[%s233 + $0xd8] sm:$0xf]
        %v297 = vld [vmem:[%s233 + $0xdc] sm:$0xf]
        %v298 = vld [vmem:[%s233 + $0xe0] sm:$0xf]
        %v299 = vld [vmem:[%s233 + $0xe4] sm:$0xf]
        %v300 = vld [vmem:[%s233 + $0xe8] sm:$0xf]
        %v301 = vld [vmem:[%s233 + $0xec] sm:$0xf]
        %v302 = vld [vmem:[%s233 + $0xf0] sm:$0xf]
        %v303 = vld [vmem:[%s233 + $0xf4] sm:$0xf]
        %v304 = vld [vmem:[%s233 + $0xf8] sm:$0xf]
        %v305 = vld [vmem:[%s233 + $0xfc] sm:$0xf]
        %v306 = vld [vmem:[%s196] sm:$0xf]
        %v307 = vld [vmem:[%s196 + $0x4] sm:$0xf]
        %v308 = vld [vmem:[%s196 + $0x8] sm:$0xf]
        %v309 = vld [vmem:[%s196 + $0xc] sm:$0xf]
        %v310 = vld [vmem:[%s196 + $0x10] sm:$0x3]
        %v375 = vunpack.c.l.b16 %v242
        %v376 = vunpack.c.l.b16 %v243
        %v377 = vunpack.c.l.b16 %v244
        %v378 = vunpack.c.l.b16 %v245
        %v379 = vunpack.c.l.b16 %v246
        %v380 = vunpack.c.l.b16 %v247
        %v381 = vunpack.c.l.b16 %v248
        %v382 = vunpack.c.l.b16 %v249
        %v383 = vunpack.c.l.b16 %v250
        %v384 = vunpack.c.l.b16 %v251
        %v385 = vunpack.c.l.b16 %v252
        %v386 = vunpack.c.l.b16 %v253
        %v387 = vunpack.c.l.b16 %v254
        %v388 = vunpack.c.l.b16 %v255
        %v389 = vunpack.c.l.b16 %v256
        %v390 = vunpack.c.l.b16 %v257
        %v391 = vunpack.c.l.b16 %v258
        %v392 = vunpack.c.l.b16 %v259
        %v393 = vunpack.c.l.b16 %v260
        %v394 = vunpack.c.l.b16 %v261
        %v395 = vunpack.c.l.b16 %v262
        %v396 = vunpack.c.l.b16 %v263
        %v397 = vunpack.c.l.b16 %v264
        %v398 = vunpack.c.l.b16 %v265
        %v399 = vunpack.c.l.b16 %v266
        %v400 = vunpack.c.l.b16 %v267
        %v401 = vunpack.c.l.b16 %v268
        %v402 = vunpack.c.l.b16 %v269
        %v403 = vunpack.c.l.b16 %v270
        %v404 = vunpack.c.l.b16 %v271
        %v405 = vunpack.c.l.b16 %v272
        %v406 = vunpack.c.l.b16 %v273
        %v407 = vunpack.c.l.b16 %v274
        %v408 = vunpack.c.l.b16 %v275
        %v409 = vunpack.c.l.b16 %v276
        %v410 = vunpack.c.l.b16 %v277
        %v411 = vunpack.c.l.b16 %v278
        %v412 = vunpack.c.l.b16 %v279
        %v413 = vunpack.c.l.b16 %v280
        %v414 = vunpack.c.l.b16 %v281
        %v415 = vunpack.c.l.b16 %v282
        %v416 = vunpack.c.l.b16 %v283
        %v417 = vunpack.c.l.b16 %v284
        %v418 = vunpack.c.l.b16 %v285
        %v419 = vunpack.c.l.b16 %v286
        %v420 = vunpack.c.l.b16 %v287
        %v421 = vunpack.c.l.b16 %v288
        %v422 = vunpack.c.l.b16 %v289
        %v423 = vunpack.c.l.b16 %v290
        %v424 = vunpack.c.l.b16 %v291
        %v425 = vunpack.c.l.b16 %v292
        %v426 = vunpack.c.l.b16 %v293
        %v427 = vunpack.c.l.b16 %v294
        %v428 = vunpack.c.l.b16 %v295
        %v429 = vunpack.c.l.b16 %v296
        %v430 = vunpack.c.l.b16 %v297
        %v431 = vunpack.c.l.b16 %v298
        %v432 = vunpack.c.l.b16 %v299
        %v433 = vunpack.c.l.b16 %v300
        %v434 = vunpack.c.l.b16 %v301
        %v435 = vunpack.c.l.b16 %v302
        %v436 = vunpack.c.l.b16 %v303
        %v437 = vunpack.c.l.b16 %v304
        %v438 = vunpack.c.l.b16 %v305
        %v439 = vpack.c.b16 %v376, %v375
        %v440 = vpack.c.b16 %v378, %v377
        %v441 = vpack.c.b16 %v380, %v379
        %v442 = vpack.c.b16 %v382, %v381
        %v443 = vpack.c.b16 %v384, %v383
        %v444 = vpack.c.b16 %v386, %v385
        %v445 = vpack.c.b16 %v388, %v387
        %v446 = vpack.c.b16 %v390, %v389
        %v447 = vpack.c.b16 %v392, %v391
        %v448 = vpack.c.b16 %v394, %v393
        %v449 = vpack.c.b16 %v396, %v395
        %v450 = vpack.c.b16 %v398, %v397
        %v451 = vpack.c.b16 %v400, %v399
        %v452 = vpack.c.b16 %v402, %v401
        %v453 = vpack.c.b16 %v404, %v403
        %v454 = vpack.c.b16 %v406, %v405
        %v455 = vpack.c.b16 %v408, %v407
        %v456 = vpack.c.b16 %v410, %v409
        %v457 = vpack.c.b16 %v412, %v411
        %v458 = vpack.c.b16 %v414, %v413
        %v459 = vpack.c.b16 %v416, %v415
        %v460 = vpack.c.b16 %v418, %v417
        %v461 = vpack.c.b16 %v420, %v419
        %v462 = vpack.c.b16 %v422, %v421
        %v463 = vpack.c.b16 %v424, %v423
        %v464 = vpack.c.b16 %v426, %v425
        %v465 = vpack.c.b16 %v428, %v427
        %v466 = vpack.c.b16 %v430, %v429
        %v467 = vpack.c.b16 %v432, %v431
        %v468 = vpack.c.b16 %v434, %v433
        %v469 = vpack.c.b16 %v436, %v435
        %v470 = vpack.c.b16 %v438, %v437
        %v476 = vunpack.c.l.b16 %v306
        %v477 = vunpack.c.l.b16 %v307
        %v478 = vunpack.c.l.b16 %v308
        %v479 = vunpack.c.l.b16 %v309
        %v480 = vunpack.c.l.b16 %v310
        %v481 = vpack.c.b16 %v477, %v476
        %v482 = vpack.c.b16 %v479, %v478
        %v483 = vpack.c.b16 %v480, %v480
        %vm486 = vcmask 293888
        %v488 = vsel %vm486, %v439, 0
        %v491 = vsel %vm486, %v440, 0
        %v494 = vsel %vm486, %v441, 0
        %v497 = vsel %vm486, %v442, 0
        %v500 = vsel %vm486, %v443, 0
        %v503 = vsel %vm486, %v444, 0
        %v506 = vsel %vm486, %v445, 0
        %v509 = vsel %vm486, %v446, 0
        %v512 = vsel %vm486, %v447, 0
        %v515 = vsel %vm486, %v448, 0
        %v518 = vsel %vm486, %v449, 0
        %v521 = vsel %vm486, %v450, 0
        %v524 = vsel %vm486, %v451, 0
        %v527 = vsel %vm486, %v452, 0
        %v530 = vsel %vm486, %v453, 0
        %v533 = vsel %vm486, %v454, 0
        %v536 = vsel %vm486, %v455, 0
        %v539 = vsel %vm486, %v456, 0
        %v542 = vsel %vm486, %v457, 0
        %v545 = vsel %vm486, %v458, 0
        %v548 = vsel %vm486, %v459, 0
        %v551 = vsel %vm486, %v460, 0
        %v554 = vsel %vm486, %v461, 0
        %v557 = vsel %vm486, %v462, 0
        %v560 = vsel %vm486, %v463, 0
        %v563 = vsel %vm486, %v464, 0
        %v566 = vsel %vm486, %v465, 0
        %v569 = vsel %vm486, %v466, 0
        %v572 = vsel %vm486, %v467, 0
        %v575 = vsel %vm486, %v468, 0
        %v578 = vsel %vm486, %v469, 0
        %v581 = vsel %vm486, %v470, 0
        %vm583 = vcmask 1041408
        %v585 = vsel %vm583, %v483, 0
        %587 = vmatprep.subr.bf16.mxu0 0
        %588 = vmatpush1.bf16.msra.mxu0 0
        %589 = vmatprep.subr.bf16.mxu0 0
        %590 = vmatpush1.bf16.msra.mxu0 0
        %591 = vmatprep.subr.bf16.mxu0 0
        %592 = vmatpush1.bf16.msra.mxu0 0
        %593 = vmatprep.subr.bf16.mxu0 0
        %594 = vmatpush1.bf16.msra.mxu0 0
        %595 = vmatprep.subr.bf16.mxu0 0
        %596 = vmatpush1.bf16.msra.mxu0 0
        %597 = vmatprep.subr.bf16.mxu0 0
        %598 = vmatpush1.bf16.msra.mxu0 %v585
        %599 = vmatprep.subr.bf16.mxu0 0
        %600 = vmatpush1.bf16.msra.mxu0 %v482
        %601 = vmatprep.subr.bf16.mxu0 0
        %602 = vmatpush1.bf16.msra.mxu0 %v481
        %603 = vmatprep.subr.bf16.mxu0 0
        %604 = vmatpush2.bf16.msra.mxu0 0
        %605 = vmatprep.subr.bf16.mxu0 0
        %606 = vmatpush2.bf16.msra.mxu0 0
        %607 = vmatprep.subr.bf16.mxu0 0
        %608 = vmatpush2.bf16.msra.mxu0 0
        %609 = vmatprep.subr.bf16.mxu0 0
        %610 = vmatpush2.bf16.msra.mxu0 0
        %611 = vmatprep.subr.bf16.mxu0 0
        %612 = vmatpush2.bf16.msra.mxu0 0
        %613 = vmatprep.subr.bf16.mxu0 0
        %614 = vmatpush2.bf16.msra.mxu0 0
        %615 = vmatprep.subr.bf16.mxu0 0
        %616 = vmatpush2.bf16.msra.mxu0 0
        %617 = vmatprep.subr.bf16.mxu0 0
        %618 = vmatpush2.bf16.msra.mxu0 0
        %619 = vmatprep.mubr.bf16.mxu0 0
        %620 = vmatmul.mubr.bf16.gmra.mxu0 %v488
        %v621 = vpop.f32.mrf.mxu0
        %v622 = vadd.f32 0.0, %v621
        %v623 = vpop.f32.mrf.mxu0
        %v624 = vpop.f32.mrf.mxu0
        %v625 = vadd.f32 0.0, %v624
        %v626 = vpop.f32.mrf.mxu0
        %627 = vmatprep.mubr.bf16.mxu0 0
        %628 = vmatmul.mubr.bf16.gmra.mxu0 %v491
        %v629 = vpop.f32.mrf.mxu0
        %v630 = vadd.f32 0.0, %v629
        %v631 = vpop.f32.mrf.mxu0
        %v632 = vpop.f32.mrf.mxu0
        %v633 = vadd.f32 0.0, %v632
        %v634 = vpop.f32.mrf.mxu0
        %635 = vmatprep.mubr.bf16.mxu0 0
        %636 = vmatmul.mubr.bf16.gmra.mxu0 %v494
        %v637 = vpop.f32.mrf.mxu0
        %v638 = vadd.f32 0.0, %v637
        %v639 = vpop.f32.mrf.mxu0
        %v640 = vpop.f32.mrf.mxu0
        %v641 = vadd.f32 0.0, %v640
        %v642 = vpop.f32.mrf.mxu0
        %643 = vmatprep.mubr.bf16.mxu0 0
        %644 = vmatmul.mubr.bf16.gmra.mxu0 %v497
        %v645 = vpop.f32.mrf.mxu0
        %v646 = vadd.f32 0.0, %v645
        %v647 = vpop.f32.mrf.mxu0
        %v648 = vpop.f32.mrf.mxu0
        %v649 = vadd.f32 0.0, %v648
        %v650 = vpop.f32.mrf.mxu0
        %651 = vmatprep.mubr.bf16.mxu0 0
        %652 = vmatmul.mubr.bf16.gmra.mxu0 %v500
        %v653 = vpop.f32.mrf.mxu0
        %v654 = vadd.f32 0.0, %v653
        %v655 = vpop.f32.mrf.mxu0
        %v656 = vpop.f32.mrf.mxu0
        %v657 = vadd.f32 0.0, %v656
        %v658 = vpop.f32.mrf.mxu0
        %659 = vmatprep.mubr.bf16.mxu0 0
        %660 = vmatmul.mubr.bf16.gmra.mxu0 %v503
        %v661 = vpop.f32.mrf.mxu0
        %v662 = vadd.f32 0.0, %v661
        %v663 = vpop.f32.mrf.mxu0
        %v664 = vpop.f32.mrf.mxu0
        %v665 = vadd.f32 0.0, %v664
        %v666 = vpop.f32.mrf.mxu0
        %667 = vmatprep.mubr.bf16.mxu0 0
        %668 = vmatmul.mubr.bf16.gmra.mxu0 %v506
        %v669 = vpop.f32.mrf.mxu0
        %v670 = vadd.f32 0.0, %v669
        %v671 = vpop.f32.mrf.mxu0
        %v672 = vpop.f32.mrf.mxu0
        %v673 = vadd.f32 0.0, %v672
        %v674 = vpop.f32.mrf.mxu0
        %675 = vmatprep.mubr.bf16.mxu0 0
        %676 = vmatmul.mubr.bf16.gmra.mxu0 %v509
        %v677 = vpop.f32.mrf.mxu0
        %v678 = vadd.f32 0.0, %v677
        %v679 = vpop.f32.mrf.mxu0
        %v680 = vpop.f32.mrf.mxu0
        %v681 = vadd.f32 0.0, %v680
        %v682 = vpop.f32.mrf.mxu0
        %683 = vmatprep.mubr.bf16.mxu0 0
        %684 = vmatmul.mubr.bf16.gmra.mxu0 %v512
        %v685 = vpop.f32.mrf.mxu0
        %v686 = vadd.f32 0.0, %v685
        %v687 = vpop.f32.mrf.mxu0
        %v688 = vpop.f32.mrf.mxu0
        %v689 = vadd.f32 0.0, %v688
        %v690 = vpop.f32.mrf.mxu0
        %691 = vmatprep.mubr.bf16.mxu0 0
        %692 = vmatmul.mubr.bf16.gmra.mxu0 %v515
        %v693 = vpop.f32.mrf.mxu0
        %v694 = vadd.f32 0.0, %v693
        %v695 = vpop.f32.mrf.mxu0
        %v696 = vpop.f32.mrf.mxu0
        %v697 = vadd.f32 0.0, %v696
        %v698 = vpop.f32.mrf.mxu0
        %699 = vmatprep.mubr.bf16.mxu0 0
        %700 = vmatmul.mubr.bf16.gmra.mxu0 %v518
        %v701 = vpop.f32.mrf.mxu0
        %v702 = vadd.f32 0.0, %v701
        %v703 = vpop.f32.mrf.mxu0
        %v704 = vpop.f32.mrf.mxu0
        %v705 = vadd.f32 0.0, %v704
        %v706 = vpop.f32.mrf.mxu0
        %707 = vmatprep.mubr.bf16.mxu0 0
        %708 = vmatmul.mubr.bf16.gmra.mxu0 %v521
        %v709 = vpop.f32.mrf.mxu0
        %v710 = vadd.f32 0.0, %v709
        %v711 = vpop.f32.mrf.mxu0
        %v712 = vpop.f32.mrf.mxu0
        %v713 = vadd.f32 0.0, %v712
        %v714 = vpop.f32.mrf.mxu0
        %715 = vmatprep.mubr.bf16.mxu0 0
        %716 = vmatmul.mubr.bf16.gmra.mxu0 %v524
        %v717 = vpop.f32.mrf.mxu0
        %v718 = vadd.f32 0.0, %v717
        %v719 = vpop.f32.mrf.mxu0
        %v720 = vpop.f32.mrf.mxu0
        %v721 = vadd.f32 0.0, %v720
        %v722 = vpop.f32.mrf.mxu0
        %723 = vmatprep.mubr.bf16.mxu0 0
        %724 = vmatmul.mubr.bf16.gmra.mxu0 %v527
        %v725 = vpop.f32.mrf.mxu0
        %v726 = vadd.f32 0.0, %v725
        %v727 = vpop.f32.mrf.mxu0
        %v728 = vpop.f32.mrf.mxu0
        %v729 = vadd.f32 0.0, %v728
        %v730 = vpop.f32.mrf.mxu0
        %731 = vmatprep.mubr.bf16.mxu0 0
        %732 = vmatmul.mubr.bf16.gmra.mxu0 %v530
        %v733 = vpop.f32.mrf.mxu0
        %v734 = vadd.f32 0.0, %v733
        %v735 = vpop.f32.mrf.mxu0
        %v736 = vpop.f32.mrf.mxu0
        %v737 = vadd.f32 0.0, %v736
        %v738 = vpop.f32.mrf.mxu0
        %739 = vmatprep.mubr.bf16.mxu0 0
        %740 = vmatmul.mubr.bf16.gmra.mxu0 %v533
        %v741 = vpop.f32.mrf.mxu0
        %v742 = vadd.f32 0.0, %v741
        %v743 = vpop.f32.mrf.mxu0
        %v744 = vpop.f32.mrf.mxu0
        %v745 = vadd.f32 0.0, %v744
        %v746 = vpop.f32.mrf.mxu0
        %747 = vmatprep.mubr.bf16.mxu0 0
        %748 = vmatmul.mubr.bf16.gmra.mxu0 %v536
        %v749 = vpop.f32.mrf.mxu0
        %v750 = vadd.f32 0.0, %v749
        %v751 = vpop.f32.mrf.mxu0
        %v752 = vpop.f32.mrf.mxu0
        %v753 = vadd.f32 0.0, %v752
        %v754 = vpop.f32.mrf.mxu0
        %755 = vmatprep.mubr.bf16.mxu0 0
        %756 = vmatmul.mubr.bf16.gmra.mxu0 %v539
        %v757 = vpop.f32.mrf.mxu0
        %v758 = vadd.f32 0.0, %v757
        %v759 = vpop.f32.mrf.mxu0
        %v760 = vpop.f32.mrf.mxu0
        %v761 = vadd.f32 0.0, %v760
        %v762 = vpop.f32.mrf.mxu0
        %763 = vmatprep.mubr.bf16.mxu0 0
        %764 = vmatmul.mubr.bf16.gmra.mxu0 %v542
        %v765 = vpop.f32.mrf.mxu0
        %v766 = vadd.f32 0.0, %v765
        %v767 = vpop.f32.mrf.mxu0
        %v768 = vpop.f32.mrf.mxu0
        %v769 = vadd.f32 0.0, %v768
        %v770 = vpop.f32.mrf.mxu0
        %771 = vmatprep.mubr.bf16.mxu0 0
        %772 = vmatmul.mubr.bf16.gmra.mxu0 %v545
        %v773 = vpop.f32.mrf.mxu0
        %v774 = vadd.f32 0.0, %v773
        %v775 = vpop.f32.mrf.mxu0
        %v776 = vpop.f32.mrf.mxu0
        %v777 = vadd.f32 0.0, %v776
        %v778 = vpop.f32.mrf.mxu0
        %779 = vmatprep.mubr.bf16.mxu0 0
        %780 = vmatmul.mubr.bf16.gmra.mxu0 %v548
        %v781 = vpop.f32.mrf.mxu0
        %v782 = vadd.f32 0.0, %v781
        %v783 = vpop.f32.mrf.mxu0
        %v784 = vpop.f32.mrf.mxu0
        %v785 = vadd.f32 0.0, %v784
        %v786 = vpop.f32.mrf.mxu0
        %787 = vmatprep.mubr.bf16.mxu0 0
        %788 = vmatmul.mubr.bf16.gmra.mxu0 %v551
        %v789 = vpop.f32.mrf.mxu0
        %v790 = vadd.f32 0.0, %v789
        %v791 = vpop.f32.mrf.mxu0
        %v792 = vpop.f32.mrf.mxu0
        %v793 = vadd.f32 0.0, %v792
        %v794 = vpop.f32.mrf.mxu0
        %795 = vmatprep.mubr.bf16.mxu0 0
        %796 = vmatmul.mubr.bf16.gmra.mxu0 %v554
        %v797 = vpop.f32.mrf.mxu0
        %v798 = vadd.f32 0.0, %v797
        %v799 = vpop.f32.mrf.mxu0
        %v800 = vpop.f32.mrf.mxu0
        %v801 = vadd.f32 0.0, %v800
        %v802 = vpop.f32.mrf.mxu0
        %803 = vmatprep.mubr.bf16.mxu0 0
        %804 = vmatmul.mubr.bf16.gmra.mxu0 %v557
        %v805 = vpop.f32.mrf.mxu0
        %v806 = vadd.f32 0.0, %v805
        %v807 = vpop.f32.mrf.mxu0
        %v808 = vpop.f32.mrf.mxu0
        %v809 = vadd.f32 0.0, %v808
        %v810 = vpop.f32.mrf.mxu0
        %811 = vmatprep.mubr.bf16.mxu0 0
        %812 = vmatmul.mubr.bf16.gmra.mxu0 %v560
        %v813 = vpop.f32.mrf.mxu0
        %v814 = vadd.f32 0.0, %v813
        %v815 = vpop.f32.mrf.mxu0
        %v816 = vpop.f32.mrf.mxu0
        %v817 = vadd.f32 0.0, %v816
        %v818 = vpop.f32.mrf.mxu0
        %819 = vmatprep.mubr.bf16.mxu0 0
        %820 = vmatmul.mubr.bf16.gmra.mxu0 %v563
        %v821 = vpop.f32.mrf.mxu0
        %v822 = vadd.f32 0.0, %v821
        %v823 = vpop.f32.mrf.mxu0
        %v824 = vpop.f32.mrf.mxu0
        %v825 = vadd.f32 0.0, %v824
        %v826 = vpop.f32.mrf.mxu0
        %827 = vmatprep.mubr.bf16.mxu0 0
        %828 = vmatmul.mubr.bf16.gmra.mxu0 %v566
        %v829 = vpop.f32.mrf.mxu0
        %v830 = vadd.f32 0.0, %v829
        %v831 = vpop.f32.mrf.mxu0
        %v832 = vpop.f32.mrf.mxu0
        %v833 = vadd.f32 0.0, %v832
        %v834 = vpop.f32.mrf.mxu0
        %835 = vmatprep.mubr.bf16.mxu0 0
        %836 = vmatmul.mubr.bf16.gmra.mxu0 %v569
        %v837 = vpop.f32.mrf.mxu0
        %v838 = vadd.f32 0.0, %v837
        %v839 = vpop.f32.mrf.mxu0
        %v840 = vpop.f32.mrf.mxu0
        %v841 = vadd.f32 0.0, %v840
        %v842 = vpop.f32.mrf.mxu0
        %843 = vmatprep.mubr.bf16.mxu0 0
        %844 = vmatmul.mubr.bf16.gmra.mxu0 %v572
        %v845 = vpop.f32.mrf.mxu0
        %v846 = vadd.f32 0.0, %v845
        %v847 = vpop.f32.mrf.mxu0
        %v848 = vpop.f32.mrf.mxu0
        %v849 = vadd.f32 0.0, %v848
        %v850 = vpop.f32.mrf.mxu0
        %851 = vmatprep.mubr.bf16.mxu0 0
        %852 = vmatmul.mubr.bf16.gmra.mxu0 %v575
        %v853 = vpop.f32.mrf.mxu0
        %v854 = vadd.f32 0.0, %v853
        %v855 = vpop.f32.mrf.mxu0
        %v856 = vpop.f32.mrf.mxu0
        %v857 = vadd.f32 0.0, %v856
        %v858 = vpop.f32.mrf.mxu0
        %859 = vmatprep.mubr.bf16.mxu0 0
        %860 = vmatmul.mubr.bf16.gmra.mxu0 %v578
        %v861 = vpop.f32.mrf.mxu0
        %v862 = vadd.f32 0.0, %v861
        %v863 = vpop.f32.mrf.mxu0
        %v864 = vpop.f32.mrf.mxu0
        %v865 = vadd.f32 0.0, %v864
        %v866 = vpop.f32.mrf.mxu0
        %867 = vmatprep.mubr.bf16.mxu0 0
        %868 = vmatmul.mubr.bf16.gmra.mxu0 %v581
        %v869 = vpop.f32.mrf.mxu0
        %v870 = vadd.f32 0.0, %v869
        %v871 = vpop.f32.mrf.mxu0
        %v872 = vpop.f32.mrf.mxu0
        %v873 = vadd.f32 0.0, %v872
        %v874 = vpop.f32.mrf.mxu0
        %875 = vdwg.mxu0
        %876 = vst [vmem:[%s221] sm:$0xff] %v622
        %877 = vst [vmem:[%s221 + $0x8] sm:$0xff] %v625
        %878 = vst [vmem:[%s221 + $0x10] sm:$0xff] %v630
        %879 = vst [vmem:[%s221 + $0x18] sm:$0xff] %v633
        %880 = vst [vmem:[%s221 + $0x20] sm:$0xff] %v638
        %881 = vst [vmem:[%s221 + $0x28] sm:$0xff] %v641
        %882 = vst [vmem:[%s221 + $0x30] sm:$0xff] %v646
        %883 = vst [vmem:[%s221 + $0x38] sm:$0xff] %v649
        %884 = vst [vmem:[%s221 + $0x40] sm:$0xff] %v654
        %885 = vst [vmem:[%s221 + $0x48] sm:$0xff] %v657
        %886 = vst [vmem:[%s221 + $0x50] sm:$0xff] %v662
        %887 = vst [vmem:[%s221 + $0x58] sm:$0xff] %v665
        %888 = vst [vmem:[%s221 + $0x60] sm:$0xff] %v670
        %889 = vst [vmem:[%s221 + $0x68] sm:$0xff] %v673
        %890 = vst [vmem:[%s221 + $0x70] sm:$0xff] %v678
        %891 = vst [vmem:[%s221 + $0x78] sm:$0xff] %v681
        %892 = vst [vmem:[%s221 + $0x80] sm:$0xff] %v686
        %893 = vst [vmem:[%s221 + $0x88] sm:$0xff] %v689
        %894 = vst [vmem:[%s221 + $0x90] sm:$0xff] %v694
        %895 = vst [vmem:[%s221 + $0x98] sm:$0xff] %v697
        %896 = vst [vmem:[%s221 + $0xa0] sm:$0xff] %v702
        %897 = vst [vmem:[%s221 + $0xa8] sm:$0xff] %v705
        %898 = vst [vmem:[%s221 + $0xb0] sm:$0xff] %v710
        %899 = vst [vmem:[%s221 + $0xb8] sm:$0xff] %v713
        %900 = vst [vmem:[%s221 + $0xc0] sm:$0xff] %v718
        %901 = vst [vmem:[%s221 + $0xc8] sm:$0xff] %v721
        %902 = vst [vmem:[%s221 + $0xd0] sm:$0xff] %v726
        %903 = vst [vmem:[%s221 + $0xd8] sm:$0xff] %v729
        %904 = vst [vmem:[%s221 + $0xe0] sm:$0xff] %v734
        %905 = vst [vmem:[%s221 + $0xe8] sm:$0xff] %v737
        %906 = vst [vmem:[%s221 + $0xf0] sm:$0xff] %v742
        %907 = vst [vmem:[%s221 + $0xf8] sm:$0xff] %v745
        %908 = vst [vmem:[%s221 + $0x100] sm:$0xff] %v750
        %909 = vst [vmem:[%s221 + $0x108] sm:$0xff] %v753
        %910 = vst [vmem:[%s221 + $0x110] sm:$0xff] %v758
        %911 = vst [vmem:[%s221 + $0x118] sm:$0xff] %v761
        %912 = vst [vmem:[%s221 + $0x120] sm:$0xff] %v766
        %913 = vst [vmem:[%s221 + $0x128] sm:$0xff] %v769
        %914 = vst [vmem:[%s221 + $0x130] sm:$0xff] %v774
        %915 = vst [vmem:[%s221 + $0x138] sm:$0xff] %v777
        %916 = vst [vmem:[%s221 + $0x140] sm:$0xff] %v782
        %917 = vst [vmem:[%s221 + $0x148] sm:$0xff] %v785
        %918 = vst [vmem:[%s221 + $0x150] sm:$0xff] %v790
        %919 = vst [vmem:[%s221 + $0x158] sm:$0xff] %v793
        %920 = vst [vmem:[%s221 + $0x160] sm:$0xff] %v798
        %921 = vst [vmem:[%s221 + $0x168] sm:$0xff] %v801
        %922 = vst [vmem:[%s221 + $0x170] sm:$0xff] %v806
        %923 = vst [vmem:[%s221 + $0x178] sm:$0xff] %v809
        %924 = vst [vmem:[%s221 + $0x180] sm:$0xff] %v814
        %925 = vst [vmem:[%s221 + $0x188] sm:$0xff] %v817
        %926 = vst [vmem:[%s221 + $0x190] sm:$0xff] %v822
        %927 = vst [vmem:[%s221 + $0x198] sm:$0xff] %v825
        %928 = vst [vmem:[%s221 + $0x1a0] sm:$0xff] %v830
        %929 = vst [vmem:[%s221 + $0x1a8] sm:$0xff] %v833
        %930 = vst [vmem:[%s221 + $0x1b0] sm:$0xff] %v838
        %931 = vst [vmem:[%s221 + $0x1b8] sm:$0xff] %v841
        %932 = vst [vmem:[%s221 + $0x1c0] sm:$0xff] %v846
        %933 = vst [vmem:[%s221 + $0x1c8] sm:$0xff] %v849
        %934 = vst [vmem:[%s221 + $0x1d0] sm:$0xff] %v854
        %935 = vst [vmem:[%s221 + $0x1d8] sm:$0xff] %v857
        %936 = vst [vmem:[%s221 + $0x1e0] sm:$0xff] %v862
        %937 = vst [vmem:[%s221 + $0x1e8] sm:$0xff] %v865
        %938 = vst [vmem:[%s221 + $0x1f0] sm:$0xff] %v870
        %939 = vst [vmem:[%s221 + $0x1f8] sm:$0xff] %v873
        %v940 = vld [vmem:[%s228] sm:$0x3]
        %v941 = vadd.f32 %v622, %v625
        %v942 = vadd.f32 %v941, %v630
        %v943 = vadd.f32 %v942, %v633
        %v944 = vadd.f32 %v943, %v638
        %v945 = vadd.f32 %v944, %v641
        %v946 = vadd.f32 %v945, %v646
        %v947 = vadd.f32 %v946, %v649
        %v948 = vadd.f32 %v947, %v654
        %v949 = vadd.f32 %v948, %v657
        %v950 = vadd.f32 %v949, %v662
        %v951 = vadd.f32 %v950, %v665
        %v952 = vadd.f32 %v951, %v670
        %v953 = vadd.f32 %v952, %v673
        %v954 = vadd.f32 %v953, %v678
        %v955 = vadd.f32 %v954, %v681
        %v956 = vadd.f32 %v955, %v686
        %v957 = vadd.f32 %v956, %v689
        %v958 = vadd.f32 %v957, %v694
        %v959 = vadd.f32 %v958, %v697
        %v960 = vadd.f32 %v959, %v702
        %v961 = vadd.f32 %v960, %v705
        %v962 = vadd.f32 %v961, %v710
        %v963 = vadd.f32 %v962, %v713
        %v964 = vadd.f32 %v963, %v718
        %v965 = vadd.f32 %v964, %v721
        %v966 = vadd.f32 %v965, %v726
        %v967 = vadd.f32 %v966, %v729
        %v968 = vadd.f32 %v967, %v734
        %v969 = vadd.f32 %v968, %v737
        %v970 = vadd.f32 %v969, %v742
        %v971 = vadd.f32 %v970, %v745
        %v972 = vadd.f32 %v971, %v750
        %v973 = vadd.f32 %v972, %v753
        %v974 = vadd.f32 %v973, %v758
        %v975 = vadd.f32 %v974, %v761
        %v976 = vadd.f32 %v975, %v766
        %v977 = vadd.f32 %v976, %v769
        %v978 = vadd.f32 %v977, %v774
        %v979 = vadd.f32 %v978, %v777
        %v980 = vadd.f32 %v979, %v782
        %v981 = vadd.f32 %v980, %v785
        %v982 = vadd.f32 %v981, %v790
        %v983 = vadd.f32 %v982, %v793
        %v984 = vadd.f32 %v983, %v798
        %v985 = vadd.f32 %v984, %v801
        %v986 = vadd.f32 %v985, %v806
        %v987 = vadd.f32 %v986, %v809
        %v988 = vadd.f32 %v987, %v814
        %v989 = vadd.f32 %v988, %v817
        %v990 = vadd.f32 %v989, %v822
        %v991 = vadd.f32 %v990, %v825
        %v992 = vadd.f32 %v991, %v830
        %v993 = vadd.f32 %v992, %v833
        %v994 = vadd.f32 %v993, %v838
        %v995 = vadd.f32 %v994, %v841
        %v996 = vadd.f32 %v995, %v846
        %v997 = vadd.f32 %v996, %v849
        %v998 = vadd.f32 %v997, %v854
        %v999 = vadd.f32 %v998, %v857
        %v1000 = vadd.f32 %v999, %v862
        %v1001 = vadd.f32 %v1000, %v865
        %v1002 = vadd.f32 %v1001, %v870
        %v1003 = vadd.f32 %v1002, %v873
        %v1004 = vrot.slane %v1003, 4
        %v1005 = vadd.f32 %v1003, %v1004
        %v1006 = vrot.slane %v1005, 2
        %v1007 = vadd.f32 %v1005, %v1006
        %v1008 = vrot.slane %v1007, 1
        %v1009 = vadd.f32 %v1007, %v1008
        %v1010 = vmul.f32 %v622, %v622
        %v1011 = vmul.f32 %v625, %v625
        %v1012 = vmul.f32 %v630, %v630
        %v1013 = vmul.f32 %v633, %v633
        %v1014 = vmul.f32 %v638, %v638
        %v1015 = vmul.f32 %v641, %v641
        %v1016 = vmul.f32 %v646, %v646
        %v1017 = vmul.f32 %v649, %v649
        %v1018 = vmul.f32 %v654, %v654
        %v1019 = vmul.f32 %v657, %v657
        %v1020 = vmul.f32 %v662, %v662
        %v1021 = vmul.f32 %v665, %v665
        %v1022 = vmul.f32 %v670, %v670
        %v1023 = vmul.f32 %v673, %v673
        %v1024 = vmul.f32 %v678, %v678
        %v1025 = vmul.f32 %v681, %v681
        %v1026 = vmul.f32 %v686, %v686
        %v1027 = vmul.f32 %v689, %v689
        %v1028 = vmul.f32 %v694, %v694
        %v1029 = vmul.f32 %v697, %v697
        %v1030 = vmul.f32 %v702, %v702
        %v1031 = vmul.f32 %v705, %v705
        %v1032 = vmul.f32 %v710, %v710
        %v1033 = vmul.f32 %v713, %v713
        %v1034 = vmul.f32 %v718, %v718
        %v1035 = vmul.f32 %v721, %v721
        %v1036 = vmul.f32 %v726, %v726
        %v1037 = vmul.f32 %v729, %v729
        %v1038 = vmul.f32 %v734, %v734
        %v1039 = vmul.f32 %v737, %v737
        %v1040 = vmul.f32 %v742, %v742
        %v1041 = vmul.f32 %v745, %v745
        %v1042 = vmul.f32 %v750, %v750
        %v1043 = vmul.f32 %v753, %v753
        %v1044 = vmul.f32 %v758, %v758
        %v1045 = vmul.f32 %v761, %v761
        %v1046 = vmul.f32 %v766, %v766
        %v1047 = vmul.f32 %v769, %v769
        %v1048 = vmul.f32 %v774, %v774
        %v1049 = vmul.f32 %v777, %v777
        %v1050 = vmul.f32 %v782, %v782
        %v1051 = vmul.f32 %v785, %v785
        %v1052 = vmul.f32 %v790, %v790
        %v1053 = vmul.f32 %v793, %v793
        %v1054 = vmul.f32 %v798, %v798
        %v1055 = vmul.f32 %v801, %v801
        %v1056 = vmul.f32 %v806, %v806
        %v1057 = vmul.f32 %v809, %v809
        %v1058 = vmul.f32 %v814, %v814
        %v1059 = vmul.f32 %v817, %v817
        %v1060 = vmul.f32 %v822, %v822
        %v1061 = vmul.f32 %v825, %v825
        %v1062 = vmul.f32 %v830, %v830
        %v1063 = vmul.f32 %v833, %v833
        %v1064 = vmul.f32 %v838, %v838
        %v1065 = vmul.f32 %v841, %v841
        %v1066 = vmul.f32 %v846, %v846
        %v1067 = vmul.f32 %v849, %v849
        %v1068 = vmul.f32 %v854, %v854
        %v1069 = vmul.f32 %v857, %v857
        %v1070 = vmul.f32 %v862, %v862
        %v1071 = vmul.f32 %v865, %v865
        %v1072 = vmul.f32 %v870, %v870
        %v1073 = vmul.f32 %v873, %v873
        %v1074 = vadd.f32 %v1010, %v1011
        %v1075 = vadd.f32 %v1074, %v1012
        %v1076 = vadd.f32 %v1075, %v1013
        %v1077 = vadd.f32 %v1076, %v1014
        %v1078 = vadd.f32 %v1077, %v1015
        %v1079 = vadd.f32 %v1078, %v1016
        %v1080 = vadd.f32 %v1079, %v1017
        %v1081 = vadd.f32 %v1080, %v1018
        %v1082 = vadd.f32 %v1081, %v1019
        %v1083 = vadd.f32 %v1082, %v1020
        %v1084 = vadd.f32 %v1083, %v1021
        %v1085 = vadd.f32 %v1084, %v1022
        %v1086 = vadd.f32 %v1085, %v1023
        %v1087 = vadd.f32 %v1086, %v1024
        %v1088 = vadd.f32 %v1087, %v1025
        %v1089 = vadd.f32 %v1088, %v1026
        %v1090 = vadd.f32 %v1089, %v1027
        %v1091 = vadd.f32 %v1090, %v1028
        %v1092 = vadd.f32 %v1091, %v1029
        %v1093 = vadd.f32 %v1092, %v1030
        %v1094 = vadd.f32 %v1093, %v1031
        %v1095 = vadd.f32 %v1094, %v1032
        %v1096 = vadd.f32 %v1095, %v1033
        %v1097 = vadd.f32 %v1096, %v1034
        %v1098 = vadd.f32 %v1097, %v1035
        %v1099 = vadd.f32 %v1098, %v1036
        %v1100 = vadd.f32 %v1099, %v1037
        %v1101 = vadd.f32 %v1100, %v1038
        %v1102 = vadd.f32 %v1101, %v1039
        %v1103 = vadd.f32 %v1102, %v1040
        %v1104 = vadd.f32 %v1103, %v1041
        %v1105 = vadd.f32 %v1104, %v1042
        %v1106 = vadd.f32 %v1105, %v1043
        %v1107 = vadd.f32 %v1106, %v1044
        %v1108 = vadd.f32 %v1107, %v1045
        %v1109 = vadd.f32 %v1108, %v1046
        %v1110 = vadd.f32 %v1109, %v1047
        %v1111 = vadd.f32 %v1110, %v1048
        %v1112 = vadd.f32 %v1111, %v1049
        %v1113 = vadd.f32 %v1112, %v1050
        %v1114 = vadd.f32 %v1113, %v1051
        %v1115 = vadd.f32 %v1114, %v1052
        %v1116 = vadd.f32 %v1115, %v1053
        %v1117 = vadd.f32 %v1116, %v1054
        %v1118 = vadd.f32 %v1117, %v1055
        %v1119 = vadd.f32 %v1118, %v1056
        %v1120 = vadd.f32 %v1119, %v1057
        %v1121 = vadd.f32 %v1120, %v1058
        %v1122 = vadd.f32 %v1121, %v1059
        %v1123 = vadd.f32 %v1122, %v1060
        %v1124 = vadd.f32 %v1123, %v1061
        %v1125 = vadd.f32 %v1124, %v1062
        %v1126 = vadd.f32 %v1125, %v1063
        %v1127 = vadd.f32 %v1126, %v1064
        %v1128 = vadd.f32 %v1127, %v1065
        %v1129 = vadd.f32 %v1128, %v1066
        %v1130 = vadd.f32 %v1129, %v1067
        %v1131 = vadd.f32 %v1130, %v1068
        %v1132 = vadd.f32 %v1131, %v1069
        %v1133 = vadd.f32 %v1132, %v1070
        %v1134 = vadd.f32 %v1133, %v1071
        %v1135 = vadd.f32 %v1134, %v1072
        %v1136 = vadd.f32 %v1135, %v1073
        %v1137 = vrot.slane %v1136, 4
        %v1138 = vadd.f32 %v1136, %v1137
        %v1139 = vrot.slane %v1138, 2
        %v1140 = vadd.f32 %v1138, %v1139
        %v1141 = vrot.slane %v1140, 1
        %v1142 = vadd.f32 %v1140, %v1141
        %vm1143 = vcmask 1040384
        %v1144 = vsel %vm1143, %v1009, %v1142
        %v1145 = vadd.f32 %v940, %v1144
        %1146 = vst [vmem:[%s228] sm:$0x3] %v1145
        %s1147 = sand.u32 %s98, 1
        %s1148 = scalar_lea.sflag [#allocation4], %s1147
        %s1149 = sand.u32 %s98, 1
        %s1150 = smul.addr %s1149, 512
        %s1151 = scalar_lea.vmem [#allocation5], %s1150
        %s1152 = sand.u32 %s124, 1
        %s1153 = scalar_lea.sflag [#allocation7], %s1152
        %s1154 = sand.u32 %s124, 1
        %s1155 = smul.addr %s1154, 2
        %s1156 = scalar_lea.vmem [#allocation6], %s1155
        // Predicated region
        $region37: #{tpu_custom_call.1} parent=27 // pred_check
          %p1157 = pneg %p108
        $region38: #{tpu_custom_call.1} parent=27 // pred_check_branch
          %1159 = sbr.rel (%p1157) target = $region40
        $region39: #{tpu_custom_call.1} parent=27 // pred_region
          %s1160 = smul.u32 64, %s29
          %s1162 = ssub.s32 8192, 8192
          %1163 = vsyncadd %s1148, %s1162
          %s1164 = smul.addr %s1160, 2
          %s1165 = sadd.s32 %s28, %s1164
          %s1166 = smul.addr %s1165, 128
          %s1167 = scalar_lea.hbm %s2, %s1166
          %s1168 = sshll.u32 %s1151, 4
          %s1169 = int_to_ptr.vmem [resolvable:$true] %s1168
          %1174 = dma.vmem_to_hbm [thread:$0]  %s1169, 8192, %s1167, %s1148, 128, 256, 8
        $region40: #{tpu_custom_call.1} parent=27 // pred_fallthru
          _
        // Predicated region
        $region41: #{tpu_custom_call.1} parent=27 // pred_check
          %p1175 = pneg %p134
        $region42: #{tpu_custom_call.1} parent=27 // pred_check_branch
          %1177 = sbr.rel (%p1175) target = $region44
        $region43: #{tpu_custom_call.1} parent=27 // pred_region
          %s1179 = ssub.s32 32, 32
          %1180 = vsyncadd %s1153, %s1179
          %s1181 = smul.addr %s28, 32
          %s1182 = scalar_lea.hbm %s3, %s1181
          %s1184 = sshll.u32 %s1156, 4
          %s1185 = int_to_ptr.vmem [resolvable:$true] %s1184
          %1187 = dma.vmem_to_hbm [thread:$0]  %s1185, 32, %s1182, %s1153
        $region44: #{tpu_custom_call.1} parent=27 // pred_fallthru
          _
      $region28: #{tpu_custom_call.1} parent=5 // pred_fallthru
        _
      %p1188 = scmp.le.s32.totalorder 2, %s19
      // Predicated region
      $region45: #{tpu_custom_call.1} parent=5 // pred_check
        %p1189 = pneg %p1188
      $region46: #{tpu_custom_call.1} parent=5 // pred_check_branch
        %1191 = sbr.rel (%p1189) target = $region48
      $region47: #{tpu_custom_call.1} parent=5 // pred_region
        %s1192 = ssub.s32 %s19, 2
        // Predicated region
        $region49: #{tpu_custom_call.1} parent=47 // pred_check
          %p1193 = pneg %p114
        $region50: #{tpu_custom_call.1} parent=47 // pred_check_branch
          %1195 = sbr.rel (%p1193) target = $region52
        $region51: #{tpu_custom_call.1} parent=47 // pred_region
          %s1196 = sand.u32 %s99, 1
          %s1197 = scalar_lea.sflag [#allocation4], %s1196
          %s1198 = sand.u32 %s99, 1
          %s1199 = smul.addr %s1198, 512
          %s1200 = scalar_lea.vmem [#allocation5], %s1199
          %1201 = dma.done %s1197, 8192
        $region52: #{tpu_custom_call.1} parent=47 // pred_fallthru
          _
        // Predicated region
        $region53: #{tpu_custom_call.1} parent=47 // pred_check
          %p1202 = pneg %p140
        $region54: #{tpu_custom_call.1} parent=47 // pred_check_branch
          %1204 = sbr.rel (%p1202) target = $region56
        $region55: #{tpu_custom_call.1} parent=47 // pred_region
          %s1205 = sand.u32 %s125, 1
          %s1206 = scalar_lea.sflag [#allocation7], %s1205
          %s1207 = sand.u32 %s125, 1
          %s1208 = smul.addr %s1207, 2
          %s1209 = scalar_lea.vmem [#allocation6], %s1208
          %1210 = dma.done %s1206, 32
        $region56: #{tpu_custom_call.1} parent=47 // pred_fallthru
          _
      $region48: #{tpu_custom_call.1} parent=5 // pred_fallthru
        _
    $region6: #{tpu_custom_call.1} parent=1 // loop_footer
      %s23 = sadd.s32 1, %s19
    $region7: #{tpu_custom_call.1} parent=1 // loop_footer_branch
      %18 = sbr.rel target = $region3
    $region8: #{tpu_custom_call.1} parent=1 // loop_exit
      _
    %1211 = vsyncpa [#allocation3], 1
    %s1212 = scalar_lea.sflag [#allocation3], 1
    %1213 = vsyncpa %s1212, 1
    %1214 = vsyncpa [#allocation4], 1
    %s1215 = scalar_lea.sflag [#allocation4], 1
    %1216 = vsyncpa %s1215, 1
    %1217 = vsyncpa [#allocation7], 1
    %s1218 = scalar_lea.sflag [#allocation7], 1
    %1219 = vsyncpa %s1218, 1

</llo_original>
